<compile_context>
chip_gen: v6e
topology: v6e:2x2x1
jax: 0.10.0
libtpu: 0.0.40
codegen_flags: <defaults>
</compile_context>

<pallas_src>
import functools

import jax
import jax.numpy as jnp
from jax.experimental import pallas as pl
from jax.experimental.pallas import tpu as pltpu

_LANE = 128
_SUBLANE = 8


def _cdiv(a, b):
    return -(-a // b)


def _round_up(v, m):
    return ((v + m - 1) // m) * m


def _round_down(v, m):
    return (v // m) * m


@functools.lru_cache(maxsize=None)
def _hw_budgets():
    """Generation-aware tiling budgets (v5e/v6e vs v7x/unknown)."""
    vmem_cap = 0
    try:
        vmem_cap = int(pltpu.get_tpu_info().vmem_capacity_bytes)
    except Exception:
        vmem_cap = 0
    if vmem_cap >= 96 * 1024 * 1024:          # v5e / v6e: 128 MiB VMEM
        return {"block_bytes": 4 * 1024 * 1024,
                "vmem_limit": 64 * 1024 * 1024,
                "max_chunk": 32 * _LANE}
    # v7x (64 MiB per TC) or unknown backend: stay conservative (safe everywhere).
    return {"block_bytes": 2 * 1024 * 1024,
            "vmem_limit": 48 * 1024 * 1024,
            "max_chunk": 16 * _LANE}


def _sublane_granularity(*dtypes):
    """Rows per packed sublane tile: 8 for f32, 16 for bf16, 32 for int8/fp8."""
    itemsize = min(jnp.dtype(d).itemsize for d in dtypes)
    return max(_SUBLANE, 32 // max(itemsize, 1))


def _pow_terms(d, y, p):
    """|d|^p and |y|^p without hitting the EUP for small integer p."""
    if p == 2:
        return d * d, y * y
    if p == 1:
        return jnp.abs(d), jnp.abs(y)
    if float(p).is_integer() and 2 < int(p) <= 8:
        k = int(p)
        ad, ay = jnp.abs(d), jnp.abs(y)
        dp, yp = ad, ay
        for _ in range(k - 1):
            dp = dp * ad
            yp = yp * ay
        return dp, yp
    return jnp.abs(d) ** p, jnp.abs(y) ** p


# --------------------------------------------------------------------------
# Kernel: rows of features, blocks (TN, CHUNK), grid (batch tiles, feat chunks).
# Outputs are resident lane-dense (TN, OW) partial sums across the chunk axis.
# --------------------------------------------------------------------------
def _lp_rows_kernel(x_ref, y_ref, dout_ref, yout_ref, *,
                    p, chunk, ow, nchunks, tail_valid):
    nsub = chunk // ow

    def partials(valid_lanes):
        # Fused slab loop: slice refs 128 lanes at a time (tile-aligned), cast,
        # diff, pow, and fold elementwise on the VPU. Live temps stay (tn, ow).
        dacc = None
        yacc = None
        for j in range(nsub):
            lo = j * ow
            if valid_lanes <= lo:            # slab entirely past the feature end
                continue
            xs = x_ref[:, lo:lo + ow].astype(jnp.float32)
            ys = y_ref[:, lo:lo + ow].astype(jnp.float32)
            if valid_lanes < lo + ow:        # the single ragged slab: mask it
                lane = jax.lax.broadcasted_iota(jnp.int32, xs.shape, 1)
                valid = lane < (valid_lanes - lo)
                xs = jnp.where(valid, xs, 0.0)
                ys = jnp.where(valid, ys, 0.0)
            dj, yj = _pow_terms(xs - ys, ys, p)
            dacc = dj if dacc is None else dacc + dj
            yacc = yj if yacc is None else yacc + yj
        return dacc, yacc

    if nchunks == 1:
        # Single feature chunk: no accumulation, direct store.
        d, yv = partials(tail_valid)
        dout_ref[...] = d
        yout_ref[...] = yv
        return

    k = pl.program_id(1)
    last = nchunks - 1

    if tail_valid == chunk:
        # Feature dim divides the chunk: no mask anywhere in the hot loop.
        d, yv = partials(chunk)

        @pl.when(k == 0)
        def _():
            dout_ref[...] = d
            yout_ref[...] = yv

        @pl.when(k != 0)
        def _():
            dout_ref[...] += d
            yout_ref[...] += yv
        return

    # Ragged feature tail: pay the mask only on the final chunk.
    @pl.when(k == 0)
    def _():
        d, yv = partials(chunk)
        dout_ref[...] = d
        yout_ref[...] = yv

    @pl.when(jnp.logical_and(k > 0, k < last))
    def _():
        d, yv = partials(chunk)
        dout_ref[...] += d
        yout_ref[...] += yv

    @pl.when(k == last)
    def _():
        d, yv = partials(tail_valid)
        dout_ref[...] += d
        yout_ref[...] += yv


def _lp_partials_rows(x2d, y2d, p, budgets, sub):
    n, f = x2d.shape
    itemsize = max(jnp.dtype(x2d.dtype).itemsize, jnp.dtype(y2d.dtype).itemsize)

    if f <= _LANE:
        chunk = ow = f
    else:
        ow = _LANE
        chunk = min(_round_up(f, _LANE), budgets["max_chunk"])

    block_elems = max(budgets["block_bytes"] // itemsize, sub * chunk)

    if n <= sub:
        tn = n
    else:
        tn = _round_down(max(block_elems // chunk, sub), sub)
        tn = min(tn, _round_up(n, sub), 2048)
        # Keep >= 2 steps on the parallel (batch) axis so both v7x TCs get work.
        tn = min(tn, max(_round_up(_cdiv(n, 2), sub), sub))

    nchunks = _cdiv(f, chunk)
    tail_valid = f - (nchunks - 1) * chunk
    grid = (_cdiv(n, tn), nchunks)

    kernel = functools.partial(_lp_rows_kernel, p=p, chunk=chunk, ow=ow,
                               nchunks=nchunks, tail_valid=tail_valid)

    dpart, ypart = pl.pallas_call(
        kernel,
        out_shape=(
            jax.ShapeDtypeStruct((n, ow), jnp.float32),
            jax.ShapeDtypeStruct((n, ow), jnp.float32),
        ),
        grid_spec=pltpu.PrefetchScalarGridSpec(
            num_scalar_prefetch=0,
            grid=grid,
            in_specs=[
                pl.BlockSpec((tn, chunk), lambda i, k: (i, k)),
                pl.BlockSpec((tn, chunk), lambda i, k: (i, k)),
            ],
            out_specs=[
                pl.BlockSpec((tn, ow), lambda i, k: (i, 0)),
                pl.BlockSpec((tn, ow), lambda i, k: (i, 0)),
            ],
        ),
        compiler_params=pltpu.CompilerParams(
            dimension_semantics=("parallel", "arbitrary"),
            vmem_limit_bytes=budgets["vmem_limit"],
        ),
    )(x2d, y2d)
    return jnp.sum(dpart, axis=-1), jnp.sum(ypart, axis=-1)


def _virtual_split(n, f, sub):
    """For tiny batches, view features as extra rows (free contiguous reshape)
    so vreg sublanes stay dense and the parallel grid axis gets >= 2 steps."""
    if n >= 2 * sub or f < 2 * _LANE:
        return 1
    g = 1
    cand = 2
    while (cand <= 512 and f % cand == 0 and f // cand >= _LANE
           and n * cand <= 1024):
        g = cand
        cand *= 2
    return g


def _lp_partial_sums(x2d, y2d, p):
    """Per-row (sum|x-y|^p, sum|y|^p), each shape (N,), float32."""
    n, f = x2d.shape
    sub = _sublane_granularity(x2d.dtype, y2d.dtype)
    budgets = _hw_budgets()
    g = _virtual_split(n, f, sub)
    if g > 1:
        d_v, y_v = _lp_partials_rows(x2d.reshape(n * g, f // g),
                                     y2d.reshape(n * g, f // g),
                                     p, budgets, sub)
        return (jnp.sum(d_v.reshape(n, g), axis=-1),
                jnp.sum(y_v.reshape(n, g), axis=-1))
    return _lp_partials_rows(x2d, y2d, p, budgets, sub)


class LpLoss:
    """JAX/Pallas port of the PyTorch LpLoss module (forward == rel)."""

    def __init__(self, d=2, p=2, size_average=True, reduction=True):
        assert d > 0 and p > 0
        self.d = d
        self.p = p
        self.reduction = reduction
        self.size_average = size_average

    def _reduce(self, per_example):
        if self.reduction:
            if self.size_average:
                return jnp.mean(per_example)
            return jnp.sum(per_example)
        return per_example

    def rel(self, x, y):
        n = x.shape[0]
        x2d = x.reshape(n, -1)
        y2d = y.reshape(n, -1)
        d_ss, y_ss = _lp_partial_sums(x2d, y2d, self.p)
        # Fused finalization: (sum|x-y|^p / sum|y|^p)^(1/p)
        if self.p == 2:
            ratios = jnp.sqrt(d_ss / y_ss)
        else:
            ratios = (d_ss / y_ss) ** (1.0 / self.p)
        return self._reduce(ratios)

    def abs(self, x, y):
        n = x.shape[0]
        h = 1.0 / (x.shape[1] - 1.0)
        x2d = x.reshape(n, -1)
        y2d = y.reshape(n, -1)
        d_ss, _ = _lp_partial_sums(x2d, y2d, self.p)
        all_norms = (h ** (self.d / self.p)) * (d_ss ** (1.0 / self.p))
        return self._reduce(all_norms)

    def __call__(self, x, y):
        return self.rel(x, y)


if __name__ == "__main__":
    key = jax.random.PRNGKey(0)
    kx, ky = jax.random.split(key)

    def ref_rel(x, y):
        n = x.shape[0]
        xd = x.reshape(n, -1).astype(jnp.float32)
        yd = y.reshape(n, -1).astype(jnp.float32)
        dn = jnp.sqrt(jnp.sum((xd - yd) ** 2, axis=1))
        yn = jnp.sqrt(jnp.sum(yd ** 2, axis=1))
        return jnp.mean(dn / yn)

    loss_fn = LpLoss(d=2, p=2, size_average=True, reduction=True)

    # Case 1: NCHW, batch=2, channels=4, spatial=16x16 -> virtual-row split path.
    x = jax.random.normal(kx, (2, 4, 16, 16), dtype=jnp.float32)
    y = jax.random.normal(ky, (2, 4, 16, 16), dtype=jnp.float32) + 1.0
    loss = loss_fn(x, y)
    jax.block_until_ready(loss)
    assert jnp.allclose(loss, ref_rel(x, y), rtol=1e-5, atol=1e-6), loss

    # Case 2: ragged feature count (exercises the masked-tail-only branch).
    x2 = jax.random.normal(kx, (16, 3, 7, 11), dtype=jnp.float32)
    y2 = jax.random.normal(ky, (16, 3, 7, 11), dtype=jnp.float32) + 0.5
    loss2 = loss_fn(x2, y2)
    jax.block_until_ready(loss2)
    assert jnp.allclose(loss2, ref_rel(x2, y2), rtol=1e-5, atol=1e-6), loss2

    # Case 3: bf16 inputs streamed natively, cast to f32 per slab inside the kernel.
    xb = x.astype(jnp.bfloat16)
    yb = y.astype(jnp.bfloat16)
    loss3 = loss_fn(xb, yb)
    jax.block_until_ready(loss3)
    assert jnp.allclose(loss3, ref_rel(xb, yb), rtol=1e-4, atol=1e-5), loss3

    print("KERNEL_OK")
</pallas_src>

<mosaic_0001>
module attributes {stable_mosaic.version = 11 : i64} {
  func.func @_lp_rows_kernel(%arg0: i32, %arg1: i32, %arg2: memref<8x128xf32, #tpu.memory_space<vmem>>, %arg3: memref<8x128xf32, #tpu.memory_space<vmem>>, %arg4: memref<8x128xf32, #tpu.memory_space<vmem>>, %arg5: memref<8x128xf32, #tpu.memory_space<vmem>>) attributes {dimension_semantics = [#tpu.dimension_semantics<parallel>, #tpu.dimension_semantics<arbitrary>], iteration_bounds = array<i64: 2, 1>, scalar_prefetch = 0 : i64, scratch_operands = 0 : i64, tpu.core_type = #tpu.core_type<tc>, window_params = [{transform_indices = @transform_0, window_bounds = array<i64: 8, 128>}, {transform_indices = @transform_1, window_bounds = array<i64: 8, 128>}, {transform_indices = @transform_2, window_bounds = array<i64: 8, 128>}, {transform_indices = @transform_3, window_bounds = array<i64: 8, 128>}]} {
    %c0 = arith.constant 0 : index
    %c0_0 = arith.constant 0 : index
    %0 = vector.load %arg2[%c0, %c0_0] : memref<8x128xf32, #tpu.memory_space<vmem>>, vector<8x128xf32>
    %c0_1 = arith.constant 0 : index
    %c0_2 = arith.constant 0 : index
    %1 = vector.load %arg3[%c0_1, %c0_2] : memref<8x128xf32, #tpu.memory_space<vmem>>, vector<8x128xf32>
    %2 = arith.subf %0, %1 : vector<8x128xf32>
    %3 = arith.mulf %2, %2 : vector<8x128xf32>
    %4 = arith.mulf %1, %1 : vector<8x128xf32>
    %c0_3 = arith.constant 0 : index
    %c0_4 = arith.constant 0 : index
    %5 = vector.load %arg4[%c0_3, %c0_4] : memref<8x128xf32, #tpu.memory_space<vmem>>, vector<8x128xf32>
    tpu.vector_store %arg4[%c0_3, %c0_4], %3 {strides = array<i32>} : memref<8x128xf32, #tpu.memory_space<vmem>>, vector<8x128xf32>,
    %c0_5 = arith.constant 0 : index
    %c0_6 = arith.constant 0 : index
    %6 = vector.load %arg5[%c0_5, %c0_6] : memref<8x128xf32, #tpu.memory_space<vmem>>, vector<8x128xf32>
    tpu.vector_store %arg5[%c0_5, %c0_6], %4 {strides = array<i32>} : memref<8x128xf32, #tpu.memory_space<vmem>>, vector<8x128xf32>,
    return
  }
  func.func @transform_0(%arg0: i32, %arg1: i32) -> (i32, i32) {
    %c0_i32 = arith.constant 0 : i32
    return %arg0, %arg1 : i32, i32
  }
  func.func @transform_1(%arg0: i32, %arg1: i32) -> (i32, i32) {
    %c0_i32 = arith.constant 0 : i32
    return %arg0, %arg1 : i32, i32
  }
  func.func @transform_2(%arg0: i32, %arg1: i32) -> (i32, i32) {
    %c0_i32 = arith.constant 0 : i32
    %c0_i32_0 = arith.constant 0 : i32
    return %arg0, %c0_i32 : i32, i32
  }
  func.func @transform_3(%arg0: i32, %arg1: i32) -> (i32, i32) {
    %c0_i32 = arith.constant 0 : i32
    %c0_i32_0 = arith.constant 0 : i32
    return %arg0, %c0_i32 : i32, i32
  }
}

</mosaic_0001>

<llo_original>
// kernel: tpu_custom_call.1
$region0: #{tpu_custom_call.1}
  #allocation0 [shape = 'u32[]', space=smem, size = 0x4, offset = 0x4, fixed_abs, tag = 'smem constant byte address 0x4 - core index']
  #allocation1 [shape = 'u32[144,128]{1,0:T(1,128)}', space=vmem, size = 0x12000, scoped, tag = 'internal scratch']
  %s0 = inlined_call_operand.hbm [shape: f32[16,128], index: 0, kind: input, shape index: {}]
  %s1 = inlined_call_operand.hbm [shape: f32[16,128], index: 1, kind: input, shape index: {}]
  %s2 = inlined_call_operand.hbm [shape: f32[16,128], index: 2, kind: output, shape index: {0}]
  %s3 = inlined_call_operand.hbm [shape: f32[16,128], index: 3, kind: output, shape index: {1}]
  %4 = xla_tuple %s2, %s3
  %s5 = sld [smem:[#allocation0]]
  $region57: #{tpu_custom_call.1} parent=0
    _
  %s7 = ssub.s32 1, %s5
  %s8 = scalar_select 0, %s7, %s5
  $region1: #{tpu_custom_call.1} parent=0
    #allocation2 [shape = 'u8[8192]{0}', space=vmem, size = 0x2000, scoped, tag = 'input window, operand 0']
    #allocation3 [shape = 's32[2]{0}', space=sflag, size = 0x8, scoped, tag = 'scoped memory for tpu_custom_call.1']
    #allocation4 [shape = 's32[2]{0}', space=sflag, size = 0x8, scoped, tag = 'scoped memory for tpu_custom_call.1']
    #allocation5 [shape = 'u8[8192]{0}', space=vmem, size = 0x2000, scoped, tag = 'input window, operand 1']
    #allocation6 [shape = 's32[2]{0}', space=sflag, size = 0x8, scoped, tag = 'scoped memory for tpu_custom_call.1']
    #allocation7 [shape = 'u8[8192]{0}', space=vmem, size = 0x2000, scoped, tag = 'output window, operand 0']
    #allocation8 [shape = 'u8[8192]{0}', space=vmem, size = 0x2000, scoped, tag = 'output window, operand 1']
    #allocation9 [shape = 's32[2]{0}', space=sflag, size = 0x8, scoped, tag = 'scoped memory for tpu_custom_call.1']
    %9 = vsyncpa [#allocation3], 0
    %s10 = scalar_lea.sflag [#allocation3], 1
    %11 = vsyncpa %s10, 0
    %12 = vsyncpa [#allocation6], 0
    %s13 = scalar_lea.sflag [#allocation6], 1
    %14 = vsyncpa %s13, 0
    %15 = vsyncpa [#allocation4], 0
    %s16 = scalar_lea.sflag [#allocation4], 1
    %17 = vsyncpa %s16, 0
    %18 = vsyncpa [#allocation9], 0
    %s19 = scalar_lea.sflag [#allocation9], 1
    %20 = vsyncpa %s19, 0
    loop: start=0, step=1, limit=4
    $region2: #{tpu_custom_call.1} parent=1 // loop_pre_header
      _
    $region3: #{tpu_custom_call.1} parent=1 // loop_header
      %s22 = sphi 0, %s26
      %p23 = scmp.ge.s32.totalorder %s22, 4
      %s29 = sphi 0, %s41
      %s30 = sphi 0, %s37
      %s31 = sphi 0, %s29
      %s32 = sphi 0, %s30
      %s33 = sphi 0, %s31
      %s34 = sphi 0, %s32
      %s46 = sphi 0, %s48
      %s49 = sphi 0, %s46
      %s50 = sphi 0, %s49
      %s66 = sphi 0, %s50
      %s74 = sphi 0, %s76
      %s77 = sphi 0, %s74
      %s78 = sphi 0, %s77
      %s94 = sphi 0, %s78
      %s100 = sphi 0, %s102
      %s103 = sphi 0, %s100
      %s104 = sphi 0, %s103
      %s120 = sphi 0, %s104
      %s126 = sphi 0, %s128
      %s129 = sphi 0, %s126
      %s130 = sphi 0, %s129
      %s146 = sphi 0, %s130
    $region4: #{tpu_custom_call.1} parent=1 // loop_header_branch
      %25 = sbr.rel (%p23) target = $region8
    $region5: #{tpu_custom_call.1} parent=1 // loop_body
      %s27 = ssub.s32 %s22, 1
      %s28 = ssub.s32 %s22, 2
      %s35 = sadd.s32 1, %s30
      %p36 = scmp.ge.s32.totalorder %s35, 1
      %s37 = scalar_select %p36, 0, %s35
      %s38 = sadd.s32 1, %s29
      %s39 = scalar_select %p36, %s38, %s29
      %p40 = scmp.ge.s32.totalorder %s39, 2
      %s41 = scalar_select %p40, 0, %s39
      %s42 = ssub.s32 %s29, %s41
      %s43 = ssub.s32 %s30, %s37
      %s44 = sor.u32 %s42, %s43
      %p45 = scmp.eq.s32.totalorder %s44, 0
      %s47 = sadd.s32 %s46, 1
      %s48 = scalar_select %p45, %s46, %s47
      %p51 = pneg %p45
      %p52 = scmp.eq.s32.totalorder %s22, 1
      %p53 = por %p51, %p52
      %p54 = scmp.ne.s32.totalorder %s46, %s49
      %p55 = scmp.eq.s32.totalorder %s22, 0
      %p56 = por %p54, %p55
      %p57 = scmp.ne.s32.totalorder %s46, %s49
      %p58 = scmp.eq.s32.totalorder %s27, 1
      %p59 = por %p57, %p58
      %p60 = scmp.ne.s32.totalorder %s49, %s50
      %p61 = scmp.eq.s32.totalorder %s27, 0
      %p62 = por %p60, %p61
      %p63 = scmp.ne.s32.totalorder %s49, %s50
      %p64 = scmp.eq.s32.totalorder %s28, 1
      %p65 = por %p63, %p64
      %p67 = scmp.ne.s32.totalorder %s50, %s66
      %p68 = scmp.eq.s32.totalorder %s28, 0
      %p69 = por %p67, %p68
      %s70 = ssub.s32 %s29, %s41
      %s71 = ssub.s32 %s30, %s37
      %s72 = sor.u32 %s70, %s71
      %p73 = scmp.eq.s32.totalorder %s72, 0
      %s75 = sadd.s32 %s74, 1
      %s76 = scalar_select %p73, %s74, %s75
      %p79 = pneg %p73
      %p80 = scmp.eq.s32.totalorder %s22, 1
      %p81 = por %p79, %p80
      %p82 = scmp.ne.s32.totalorder %s74, %s77
      %p83 = scmp.eq.s32.totalorder %s22, 0
      %p84 = por %p82, %p83
      %p85 = scmp.ne.s32.totalorder %s74, %s77
      %p86 = scmp.eq.s32.totalorder %s27, 1
      %p87 = por %p85, %p86
      %p88 = scmp.ne.s32.totalorder %s77, %s78
      %p89 = scmp.eq.s32.totalorder %s27, 0
      %p90 = por %p88, %p89
      %p91 = scmp.ne.s32.totalorder %s77, %s78
      %p92 = scmp.eq.s32.totalorder %s28, 1
      %p93 = por %p91, %p92
      %p95 = scmp.ne.s32.totalorder %s78, %s94
      %p96 = scmp.eq.s32.totalorder %s28, 0
      %p97 = por %p95, %p96
      %s98 = ssub.s32 %s29, %s41
      %p99 = scmp.eq.s32.totalorder %s98, 0
      %s101 = sadd.s32 %s100, 1
      %s102 = scalar_select %p99, %s100, %s101
      %p105 = pneg %p99
      %p106 = scmp.eq.s32.totalorder %s22, 1
      %p107 = por %p105, %p106
      %p108 = scmp.ne.s32.totalorder %s100, %s103
      %p109 = scmp.eq.s32.totalorder %s22, 0
      %p110 = por %p108, %p109
      %p111 = scmp.ne.s32.totalorder %s100, %s103
      %p112 = scmp.eq.s32.totalorder %s27, 1
      %p113 = por %p111, %p112
      %p114 = scmp.ne.s32.totalorder %s103, %s104
      %p115 = scmp.eq.s32.totalorder %s27, 0
      %p116 = por %p114, %p115
      %p117 = scmp.ne.s32.totalorder %s103, %s104
      %p118 = scmp.eq.s32.totalorder %s28, 1
      %p119 = por %p117, %p118
      %p121 = scmp.ne.s32.totalorder %s104, %s120
      %p122 = scmp.eq.s32.totalorder %s28, 0
      %p123 = por %p121, %p122
      %s124 = ssub.s32 %s29, %s41
      %p125 = scmp.eq.s32.totalorder %s124, 0
      %s127 = sadd.s32 %s126, 1
      %s128 = scalar_select %p125, %s126, %s127
      %p131 = pneg %p125
      %p132 = scmp.eq.s32.totalorder %s22, 1
      %p133 = por %p131, %p132
      %p134 = scmp.ne.s32.totalorder %s126, %s129
      %p135 = scmp.eq.s32.totalorder %s22, 0
      %p136 = por %p134, %p135
      %p137 = scmp.ne.s32.totalorder %s126, %s129
      %p138 = scmp.eq.s32.totalorder %s27, 1
      %p139 = por %p137, %p138
      %p140 = scmp.ne.s32.totalorder %s129, %s130
      %p141 = scmp.eq.s32.totalorder %s27, 0
      %p142 = por %p140, %p141
      %p143 = scmp.ne.s32.totalorder %s129, %s130
      %p144 = scmp.eq.s32.totalorder %s28, 1
      %p145 = por %p143, %p144
      %p147 = scmp.ne.s32.totalorder %s130, %s146
      %p148 = scmp.eq.s32.totalorder %s28, 0
      %p149 = por %p147, %p148
      %p150 = scmp.le.s32.totalorder 1, %s22
      %p151 = scmp.lt.s32.totalorder %s22, 3
      %p152 = pnand %p150, %p151
      %p153 = pneg %p152
      // Predicated region
      $region9: #{tpu_custom_call.1} parent=5 // pred_check
        _
      $region10: #{tpu_custom_call.1} parent=5 // pred_check_branch
        %155 = sbr.rel (%p152) target = $region12
      $region11: #{tpu_custom_call.1} parent=5 // pred_region
        %s156 = ssub.s32 %s22, 1
      $region12: #{tpu_custom_call.1} parent=5 // pred_fallthru
        _
      %p157 = scmp.lt.s32.totalorder %s22, 2
      // Predicated region
      $region13: #{tpu_custom_call.1} parent=5 // pred_check
        %p158 = pneg %p157
      $region14: #{tpu_custom_call.1} parent=5 // pred_check_branch
        %160 = sbr.rel (%p158) target = $region16
      $region15: #{tpu_custom_call.1} parent=5 // pred_region
        // Predicated region
        $region17: #{tpu_custom_call.1} parent=15 // pred_check
          %p161 = pneg %p56
        $region18: #{tpu_custom_call.1} parent=15 // pred_check_branch
          %163 = sbr.rel (%p161) target = $region20
        $region19: #{tpu_custom_call.1} parent=15 // pred_region
          %s164 = sand.u32 %s46, 1
          %s165 = scalar_lea.sflag [#allocation3], %s164
          %s166 = sand.u32 %s46, 1
          %s167 = smul.addr %s166, 8
          %s168 = scalar_lea.vmem [#allocation2], %s167
          %s170 = ssub.s32 128, 128
          %171 = vsyncadd %s165, %s170
          %s172 = sadd.s32 %s30, %s29
          %s173 = smul.addr %s172, 128
          %s174 = scalar_lea.hbm %s0, %s173
          %s176 = sshll.u32 %s168, 4
          %s177 = int_to_ptr.vmem [resolvable:$true] %s176
          %179 = dma.hbm_to_vmem [thread:$0]  %s174, 128, %s177, %s165
        $region20: #{tpu_custom_call.1} parent=15 // pred_fallthru
          _
        // Predicated region
        $region21: #{tpu_custom_call.1} parent=15 // pred_check
          %p180 = pneg %p84
        $region22: #{tpu_custom_call.1} parent=15 // pred_check_branch
          %182 = sbr.rel (%p180) target = $region24
        $region23: #{tpu_custom_call.1} parent=15 // pred_region
          %s183 = sand.u32 %s74, 1
          %s184 = scalar_lea.sflag [#allocation6], %s183
          %s185 = sand.u32 %s74, 1
          %s186 = smul.addr %s185, 8
          %s187 = scalar_lea.vmem [#allocation5], %s186
          %s189 = ssub.s32 128, 128
          %190 = vsyncadd %s184, %s189
          %s191 = sadd.s32 %s30, %s29
          %s192 = smul.addr %s191, 128
          %s193 = scalar_lea.hbm %s1, %s192
          %s195 = sshll.u32 %s187, 4
          %s196 = int_to_ptr.vmem [resolvable:$true] %s195
          %198 = dma.hbm_to_vmem [thread:$0]  %s193, 128, %s196, %s184
        $region24: #{tpu_custom_call.1} parent=15 // pred_fallthru
          _
      $region16: #{tpu_custom_call.1} parent=5 // pred_fallthru
        _
      %p199 = scmp.le.s32.totalorder 1, %s22
      %p200 = scmp.lt.s32.totalorder %s22, 3
      %p201 = pnand %p199, %p200
      %p202 = pneg %p201
      // Predicated region
      $region25: #{tpu_custom_call.1} parent=5 // pred_check
        _
      $region26: #{tpu_custom_call.1} parent=5 // pred_check_branch
        %204 = sbr.rel (%p201) target = $region28
      $region27: #{tpu_custom_call.1} parent=5 // pred_region
        %s205 = ssub.s32 %s22, 1
        %s206 = sand.u32 %s49, 1
        %s207 = scalar_lea.sflag [#allocation3], %s206
        %s208 = sand.u32 %s49, 1
        %s209 = smul.addr %s208, 8
        %s210 = scalar_lea.vmem [#allocation2], %s209
        // Predicated region
        $region29: #{tpu_custom_call.1} parent=27 // pred_check
          %p211 = pneg %p62
        $region30: #{tpu_custom_call.1} parent=27 // pred_check_branch
          %213 = sbr.rel (%p211) target = $region32
        $region31: #{tpu_custom_call.1} parent=27 // pred_region
          %214 = dma.done %s207, 128
        $region32: #{tpu_custom_call.1} parent=27 // pred_fallthru
          _
        %s215 = sand.u32 %s77, 1
        %s216 = scalar_lea.sflag [#allocation6], %s215
        %s217 = sand.u32 %s77, 1
        %s218 = smul.addr %s217, 8
        %s219 = scalar_lea.vmem [#allocation5], %s218
        // Predicated region
        $region33: #{tpu_custom_call.1} parent=27 // pred_check
          %p220 = pneg %p90
        $region34: #{tpu_custom_call.1} parent=27 // pred_check_branch
          %222 = sbr.rel (%p220) target = $region36
        $region35: #{tpu_custom_call.1} parent=27 // pred_region
          %223 = dma.done %s216, 128
        $region36: #{tpu_custom_call.1} parent=27 // pred_fallthru
          _
        %s224 = sand.u32 %s49, 1
        %s225 = scalar_lea.sflag [#allocation3], %s224
        %s226 = sand.u32 %s49, 1
        %s227 = smul.addr %s226, 8
        %s228 = scalar_lea.vmem [#allocation2], %s227
        %p229 = pneg %p62
        %p230 = pneg %p59
        %s231 = sand.u32 %s77, 1
        %s232 = scalar_lea.sflag [#allocation6], %s231
        %s233 = sand.u32 %s77, 1
        %s234 = smul.addr %s233, 8
        %s235 = scalar_lea.vmem [#allocation5], %s234
        %p236 = pneg %p90
        %p237 = pneg %p87
        %p238 = pneg %p116
        %p239 = pneg %p113
        %s240 = sand.u32 %s103, 1
        %s241 = scalar_lea.sflag [#allocation4], %s240
        %s242 = sand.u32 %s103, 1
        %s243 = smul.addr %s242, 8
        %s244 = scalar_lea.vmem [#allocation7], %s243
        %p245 = pneg %p142
        %p246 = pneg %p139
        %s247 = sand.u32 %s129, 1
        %s248 = scalar_lea.sflag [#allocation9], %s247
        %s249 = sand.u32 %s129, 1
        %s250 = smul.addr %s249, 8
        %s251 = scalar_lea.vmem [#allocation8], %s250
        %v252 = vld [vmem:[%s210] sm:$0xff]
        %v253 = vld [vmem:[%s219] sm:$0xff]
        %v254 = vsub.f32 %v252, %v253
        %v255 = vmul.f32 %v254, %v254
        %v256 = vmul.f32 %v253, %v253
        %257 = vst [vmem:[%s244] sm:$0xff] %v255
        %258 = vst [vmem:[%s251] sm:$0xff] %v256
        %s259 = sand.u32 %s103, 1
        %s260 = scalar_lea.sflag [#allocation4], %s259
        %s261 = sand.u32 %s103, 1
        %s262 = smul.addr %s261, 8
        %s263 = scalar_lea.vmem [#allocation7], %s262
        %s264 = sand.u32 %s129, 1
        %s265 = scalar_lea.sflag [#allocation9], %s264
        %s266 = sand.u32 %s129, 1
        %s267 = smul.addr %s266, 8
        %s268 = scalar_lea.vmem [#allocation8], %s267
        // Predicated region
        $region37: #{tpu_custom_call.1} parent=27 // pred_check
          %p269 = pneg %p113
        $region38: #{tpu_custom_call.1} parent=27 // pred_check_branch
          %271 = sbr.rel (%p269) target = $region40
        $region39: #{tpu_custom_call.1} parent=27 // pred_region
          %s273 = ssub.s32 128, 128
          %274 = vsyncadd %s260, %s273
          %s275 = smul.addr %s31, 128
          %s276 = scalar_lea.hbm %s2, %s275
          %s278 = sshll.u32 %s263, 4
          %s279 = int_to_ptr.vmem [resolvable:$true] %s278
          %281 = dma.vmem_to_hbm [thread:$0]  %s279, 128, %s276, %s260
        $region40: #{tpu_custom_call.1} parent=27 // pred_fallthru
          _
        // Predicated region
        $region41: #{tpu_custom_call.1} parent=27 // pred_check
          %p282 = pneg %p139
        $region42: #{tpu_custom_call.1} parent=27 // pred_check_branch
          %284 = sbr.rel (%p282) target = $region44
        $region43: #{tpu_custom_call.1} parent=27 // pred_region
          %s286 = ssub.s32 128, 128
          %287 = vsyncadd %s265, %s286
          %s288 = smul.addr %s31, 128
          %s289 = scalar_lea.hbm %s3, %s288
          %s291 = sshll.u32 %s268, 4
          %s292 = int_to_ptr.vmem [resolvable:$true] %s291
          %294 = dma.vmem_to_hbm [thread:$0]  %s292, 128, %s289, %s265
        $region44: #{tpu_custom_call.1} parent=27 // pred_fallthru
          _
      $region28: #{tpu_custom_call.1} parent=5 // pred_fallthru
        _
      %p295 = scmp.le.s32.totalorder 2, %s22
      // Predicated region
      $region45: #{tpu_custom_call.1} parent=5 // pred_check
        %p296 = pneg %p295
      $region46: #{tpu_custom_call.1} parent=5 // pred_check_branch
        %298 = sbr.rel (%p296) target = $region48
      $region47: #{tpu_custom_call.1} parent=5 // pred_region
        %s299 = ssub.s32 %s22, 2
        // Predicated region
        $region49: #{tpu_custom_call.1} parent=47 // pred_check
          %p300 = pneg %p119
        $region50: #{tpu_custom_call.1} parent=47 // pred_check_branch
          %302 = sbr.rel (%p300) target = $region52
        $region51: #{tpu_custom_call.1} parent=47 // pred_region
          %s303 = sand.u32 %s104, 1
          %s304 = scalar_lea.sflag [#allocation4], %s303
          %s305 = sand.u32 %s104, 1
          %s306 = smul.addr %s305, 8
          %s307 = scalar_lea.vmem [#allocation7], %s306
          %308 = dma.done %s304, 128
        $region52: #{tpu_custom_call.1} parent=47 // pred_fallthru
          _
        // Predicated region
        $region53: #{tpu_custom_call.1} parent=47 // pred_check
          %p309 = pneg %p145
        $region54: #{tpu_custom_call.1} parent=47 // pred_check_branch
          %311 = sbr.rel (%p309) target = $region56
        $region55: #{tpu_custom_call.1} parent=47 // pred_region
          %s312 = sand.u32 %s130, 1
          %s313 = scalar_lea.sflag [#allocation9], %s312
          %s314 = sand.u32 %s130, 1
          %s315 = smul.addr %s314, 8
          %s316 = scalar_lea.vmem [#allocation8], %s315
          %317 = dma.done %s313, 128
        $region56: #{tpu_custom_call.1} parent=47 // pred_fallthru
          _
      $region48: #{tpu_custom_call.1} parent=5 // pred_fallthru
        _
    $region6: #{tpu_custom_call.1} parent=1 // loop_footer
      %s26 = sadd.s32 1, %s22
    $region7: #{tpu_custom_call.1} parent=1 // loop_footer_branch
      %21 = sbr.rel target = $region3
    $region8: #{tpu_custom_call.1} parent=1 // loop_exit
      _
    %318 = vsyncpa [#allocation3], 1
    %s319 = scalar_lea.sflag [#allocation3], 1
    %320 = vsyncpa %s319, 1
    %321 = vsyncpa [#allocation6], 1
    %s322 = scalar_lea.sflag [#allocation6], 1
    %323 = vsyncpa %s322, 1
    %324 = vsyncpa [#allocation4], 1
    %s325 = scalar_lea.sflag [#allocation4], 1
    %326 = vsyncpa %s325, 1
    %327 = vsyncpa [#allocation9], 1
    %s328 = scalar_lea.sflag [#allocation9], 1
    %329 = vsyncpa %s328, 1

</llo_original>
